<compile_context>
chip_gen: v5e
topology: v5e:2x2
jax: 0.10.0
libtpu: 0.0.40
codegen_flags: <defaults>
</compile_context>

<pallas_src>
import functools
import math

import jax
import jax.numpy as jnp
import numpy as np
from jax.experimental import pallas as pl
from jax.experimental.pallas import tpu as pltpu


def _pick_tile(n: int, max_tile: int) -> int:
    """Largest multiple-of-8 divisor of n that is <= max_tile, else n itself."""
    if n <= max_tile:
        return n
    start = max_tile - (max_tile % 8)
    for t in range(start, 7, -8):
        if n % t == 0:
            return t
    return n


# ----------------------------------------------------------------------------
# Kernel A: LayerNorm + packed QKV projection over a (TR, E) row tile.
# ----------------------------------------------------------------------------
def ln_qkv_kernel(x_ref, gamma_ref, beta_ref, w_in_t_ref, b_in_ref,
                  q_ref, kv_ref, *, eps):
    x = x_ref[...].astype(jnp.float32)                       # (TR, E)
    E = x.shape[-1]

    # LayerNorm (biased variance, f32 stats) — matches nn.LayerNorm.
    mean = jnp.mean(x, axis=-1, keepdims=True)
    xc = x - mean
    var = jnp.mean(xc * xc, axis=-1, keepdims=True)
    x_ln = xc * jax.lax.rsqrt(var + eps)
    x_ln = x_ln * gamma_ref[...] + beta_ref[...]             # (TR, E) f32

    # Single MXU matmul in compute dtype with f32 accumulation. The 1/sqrt(Dh)
    # scale is already folded into the Q slice of w_in_t / b_in.
    qkv = jnp.dot(x_ln.astype(w_in_t_ref.dtype), w_in_t_ref[...],
                  preferred_element_type=jnp.float32)
    qkv = qkv + b_in_ref[...]                                # (TR, 3E) f32

    q_ref[...] = qkv[:, :E].astype(q_ref.dtype)
    kv_ref[...] = qkv[:, E:].astype(kv_ref.dtype)


# ----------------------------------------------------------------------------
# Kernel B: head-batched attention for one (batch, query tile) + output proj.
# ----------------------------------------------------------------------------
def attn_out_kernel(q_ref, kv_ref, w_out_t_ref, b_out_ref, o_ref, *, num_heads):
    q = q_ref[0]                                             # (TQ, E) compute dtype
    kv = kv_ref[0]                                           # (S, 2E)
    TQ, E = q.shape
    S = kv.shape[0]
    H = num_heads
    Dh = E // H

    k = kv[:, :E]                                            # lane slices at
    v = kv[:, E:]                                            # multiples of 128

    # Head-batched layout: (tokens, E) -> (H, tokens, Dh). einshape swaps the
    # two major dims only; the minor (lane) dim stays in place.
    q3 = pltpu.einshape("mhd->hmd", q.reshape(TQ, H, Dh))    # (H, TQ, Dh)
    k3 = pltpu.einshape("mhd->hmd", k.reshape(S, H, Dh))     # (H, S, Dh)
    v3 = pltpu.einshape("mhd->hmd", v.reshape(S, H, Dh))     # (H, S, Dh)

    # Scores: one batched MXU einsum contracting the last dim of both operands
    # (no explicit k.T / relayout). f32 accumulation. Scale already folded in.
    s = jnp.einsum("hqd,hkd->hqk", q3, k3,
                   preferred_element_type=jnp.float32)       # (H, TQ, S)

    # Numerically stable softmax entirely in f32. Normalization uses an EXACT
    # reciprocal of the (H, TQ, 1) row sums (cheap — only H*TQ scalars) so the
    # f32 path tracks the reference; the broadcast multiply stays on the VPU.
    m = jnp.max(s, axis=-1, keepdims=True)
    p = jnp.exp(s - m)
    denom = jnp.sum(p, axis=-1, keepdims=True)
    p = p * (1.0 / denom)

    attn3 = jnp.einsum("hqk,hkd->hqd", p.astype(v3.dtype), v3,
                       preferred_element_type=jnp.float32)   # (H, TQ, Dh) f32

    # Merge heads back into a lane-dense (TQ, E) tile, then a single
    # large-contraction output-projection matmul on the MXU.
    attn = pltpu.einshape("hmd->mhd", attn3).reshape(TQ, E)
    out = jnp.dot(attn.astype(w_out_t_ref.dtype), w_out_t_ref[...],
                  preferred_element_type=jnp.float32)
    out = out + b_out_ref[...]                               # (TQ, E) f32
    o_ref[0] = out.astype(o_ref.dtype)


# ----------------------------------------------------------------------------
# Wrapper
# ----------------------------------------------------------------------------
def mas_forward(x, params, *, num_heads, eps=1e-5, compute_dtype=jnp.bfloat16):
    """x: (B, S, E) float32. params: LN + packed-MHA weights (PyTorch layout)."""
    B, S, E = x.shape
    assert E % num_heads == 0
    Dh = E // num_heads

    # One-time parameter prep (plain XLA ops, outside the kernels): transpose
    # weights, fold 1/sqrt(Dh) into the Q slice, cast MXU weights to the
    # compute dtype, keep biases / LN affine in f32.
    scale = 1.0 / math.sqrt(Dh)
    w_in = params["in_proj_weight"].astype(jnp.float32)       # (3E, E)
    b_in = params["in_proj_bias"].astype(jnp.float32)         # (3E,)
    w_in = w_in.at[:E].multiply(scale)
    b_in = b_in.at[:E].multiply(scale)

    w_in_t = w_in.T.astype(compute_dtype)                     # (E, 3E)
    b_in = b_in.reshape(1, 3 * E)                              # f32
    w_out_t = params["out_proj_weight"].T.astype(compute_dtype)  # (E, E)
    b_out = params["out_proj_bias"].reshape(1, E).astype(jnp.float32)
    gamma = params["ln_gamma"].reshape(1, E).astype(jnp.float32)
    beta = params["ln_beta"].reshape(1, E).astype(jnp.float32)

    # ---- Kernel A: LayerNorm + QKV projection over flattened token rows ----
    N = B * S
    TR = _pick_tile(N, 512)
    x2 = x.reshape(N, E)
    q_flat, kv_flat = pl.pallas_call(
        functools.partial(ln_qkv_kernel, eps=eps),
        out_shape=(jax.ShapeDtypeStruct((N, E), compute_dtype),
                   jax.ShapeDtypeStruct((N, 2 * E), compute_dtype)),
        grid_spec=pltpu.PrefetchScalarGridSpec(
            num_scalar_prefetch=0,
            grid=(N // TR,),
            in_specs=[
                pl.BlockSpec((TR, E), lambda r: (r, 0)),
                pl.BlockSpec((1, E), lambda r: (0, 0)),
                pl.BlockSpec((1, E), lambda r: (0, 0)),
                pl.BlockSpec((E, 3 * E), lambda r: (0, 0)),
                pl.BlockSpec((1, 3 * E), lambda r: (0, 0)),
            ],
            out_specs=[
                pl.BlockSpec((TR, E), lambda r: (r, 0)),
                pl.BlockSpec((TR, 2 * E), lambda r: (r, 0)),
            ]),
        compiler_params=pltpu.CompilerParams(
            dimension_semantics=("parallel",)),
    )(x2, gamma, beta, w_in_t, b_in)

    q = q_flat.reshape(B, S, E)
    kv = kv_flat.reshape(B, S, 2 * E)

    # ---- Kernel B: attention + output projection, tiled over query rows ----
    TQ = _pick_tile(S, 128)
    # TODO(synk): for very long sequences add a K/V grid axis with a
    # flash-style online softmax instead of the full-(S) K/V block, and raise
    # vmem_limit_bytes via pltpu.CompilerParams for the smaller v7x VMEM.
    out = pl.pallas_call(
        functools.partial(attn_out_kernel, num_heads=num_heads),
        out_shape=jax.ShapeDtypeStruct((B, S, E), x.dtype),
        grid_spec=pltpu.PrefetchScalarGridSpec(
            num_scalar_prefetch=0,
            grid=(B, S // TQ),
            in_specs=[
                pl.BlockSpec((1, TQ, E), lambda b, qi: (b, qi, 0)),
                pl.BlockSpec((1, S, 2 * E), lambda b, qi: (b, 0, 0)),
                pl.BlockSpec((E, E), lambda b, qi: (0, 0)),
                pl.BlockSpec((1, E), lambda b, qi: (0, 0)),
            ],
            out_specs=pl.BlockSpec((1, TQ, E), lambda b, qi: (b, qi, 0))),
        compiler_params=pltpu.CompilerParams(
            dimension_semantics=("parallel", "parallel")),
    )(q, kv, w_out_t, b_out)
    return out


# ----------------------------------------------------------------------------
# Pure-JAX reference (mirrors torch nn.LayerNorm + nn.MultiheadAttention).
# ----------------------------------------------------------------------------
def mas_reference(x, params, *, num_heads, eps=1e-5):
    B, S, E = x.shape
    Dh = E // num_heads
    mean = jnp.mean(x, axis=-1, keepdims=True)
    var = jnp.mean((x - mean) ** 2, axis=-1, keepdims=True)
    x_ln = (x - mean) / jnp.sqrt(var + eps)
    x_ln = x_ln * params["ln_gamma"] + params["ln_beta"]

    qkv = jnp.einsum("bse,fe->bsf", x_ln, params["in_proj_weight"]) + params["in_proj_bias"]
    q, k, v = jnp.split(qkv, 3, axis=-1)

    def split_heads(t):  # (B, S, E) -> (B, H, S, Dh)
        return t.reshape(B, S, num_heads, Dh).transpose(0, 2, 1, 3)

    qh, kh, vh = split_heads(q), split_heads(k), split_heads(v)
    scores = jnp.einsum("bhqd,bhkd->bhqk", qh, kh) / math.sqrt(Dh)
    p = jax.nn.softmax(scores, axis=-1)
    o = jnp.einsum("bhqk,bhkd->bhqd", p, vh)
    o = o.transpose(0, 2, 1, 3).reshape(B, S, E)
    return jnp.einsum("bse,fe->bsf", o, params["out_proj_weight"]) + params["out_proj_bias"]


def init_params(key, embedding_dim):
    E = embedding_dim
    k1, k2, _ = jax.random.split(key, 3)
    # Deterministic synthetic init (xavier-ish scaling); not a checkpoint load.
    return {
        "ln_gamma": jnp.ones((E,), jnp.float32),
        "ln_beta": jnp.zeros((E,), jnp.float32),
        "in_proj_weight": jax.random.normal(k1, (3 * E, E), jnp.float32)
                          * (1.0 / math.sqrt(E)),
        "in_proj_bias": jnp.zeros((3 * E,), jnp.float32),
        "out_proj_weight": jax.random.normal(k2, (E, E), jnp.float32)
                           * (1.0 / math.sqrt(E)),
        "out_proj_bias": jnp.zeros((E,), jnp.float32),
    }


if __name__ == "__main__":
    # Small shapes consistent with the module (embedding_dim divisible by
    # num_heads); E=128 keeps every HBM-facing last dim lane-dense.
    B, S, E, H = 2, 16, 128, 4
    key = jax.random.PRNGKey(0)
    kx, kp = jax.random.split(key)
    x = jax.random.normal(kx, (B, S, E), jnp.float32)
    params = init_params(kp, E)

    ref = jax.block_until_ready(mas_reference(x, params, num_heads=H))

    # f32 MXU-operand path: structural check. Small slack covers the folded
    # 1/sqrt(Dh) scale and MXU accumulation-order differences vs. the XLA ref.
    out_f32 = jax.block_until_ready(
        mas_forward(x, params, num_heads=H, compute_dtype=jnp.float32))
    assert out_f32.shape == (B, S, E)
    np.testing.assert_allclose(np.asarray(out_f32), np.asarray(ref),
                               rtol=5e-3, atol=5e-3)

    # bf16 MXU-operand path (default / perf path on v6e & v7x): f32 LN stats,
    # f32 softmax and f32 accumulation, so only operand rounding differs.
    out_bf16 = jax.block_until_ready(
        mas_forward(x, params, num_heads=H, compute_dtype=jnp.bfloat16))
    assert out_bf16.shape == (B, S, E)
    np.testing.assert_allclose(np.asarray(out_bf16), np.asarray(ref),
                               rtol=5e-2, atol=5e-2)
    print("KERNEL_OK")
</pallas_src>

<mosaic_0001>
module attributes {stable_mosaic.version = 11 : i64} {
  func.func @ln_qkv_kernel(%arg0: i32, %arg1: memref<32x128xf32, #tpu.memory_space<vmem>>, %arg2: memref<1x128xf32, #tpu.memory_space<vmem>>, %arg3: memref<1x128xf32, #tpu.memory_space<vmem>>, %arg4: memref<128x384xf32, #tpu.memory_space<vmem>>, %arg5: memref<1x384xf32, #tpu.memory_space<vmem>>, %arg6: memref<32x128xf32, #tpu.memory_space<vmem>>, %arg7: memref<32x256xf32, #tpu.memory_space<vmem>>) attributes {dimension_semantics = [#tpu.dimension_semantics<parallel>], iteration_bounds = array<i64: 1>, scalar_prefetch = 0 : i64, scratch_operands = 0 : i64, tpu.core_type = #tpu.core_type<tc>, window_params = [{transform_indices = @transform_0, window_bounds = array<i64: 32, 128>}, {pipeline_mode = #tpu.pipeline_mode<synchronous>, transform_indices = @transform_1, window_bounds = array<i64: 1, 128>}, {pipeline_mode = #tpu.pipeline_mode<synchronous>, transform_indices = @transform_2, window_bounds = array<i64: 1, 128>}, {pipeline_mode = #tpu.pipeline_mode<synchronous>, transform_indices = @transform_3, window_bounds = array<i64: 128, 384>}, {pipeline_mode = #tpu.pipeline_mode<synchronous>, transform_indices = @transform_4, window_bounds = array<i64: 1, 384>}, {transform_indices = @transform_5, window_bounds = array<i64: 32, 128>}, {transform_indices = @transform_6, window_bounds = array<i64: 32, 256>}]} {
    %c0 = arith.constant 0 : index
    %c0_0 = arith.constant 0 : index
    %0 = vector.load %arg1[%c0, %c0_0] : memref<32x128xf32, #tpu.memory_space<vmem>>, vector<32x128xf32>
    %cst = arith.constant dense<0.000000e+00> : vector<32xf32>
    %1 = vector.multi_reduction <add>, %0, %cst [1] : vector<32x128xf32> to vector<32xf32>
    %2 = vector.shape_cast %1 : vector<32xf32> to vector<32x1xf32>
    %cst_1 = arith.constant 1.280000e+02 : f32
    %3 = vector.broadcast %cst_1 : f32 to vector<32x1xf32>
    %4 = arith.divf %2, %3 : vector<32x1xf32>
    %5 = vector.broadcast %4 : vector<32x1xf32> to vector<32x128xf32>
    %6 = arith.subf %0, %5 : vector<32x128xf32>
    %7 = arith.mulf %6, %6 : vector<32x128xf32>
    %cst_2 = arith.constant dense<0.000000e+00> : vector<32xf32>
    %8 = vector.multi_reduction <add>, %7, %cst_2 [1] : vector<32x128xf32> to vector<32xf32>
    %9 = vector.shape_cast %8 : vector<32xf32> to vector<32x1xf32>
    %cst_3 = arith.constant 1.280000e+02 : f32
    %10 = vector.broadcast %cst_3 : f32 to vector<32x1xf32>
    %11 = arith.divf %9, %10 : vector<32x1xf32>
    %cst_4 = arith.constant 9.99999974E-6 : f32
    %12 = vector.broadcast %cst_4 : f32 to vector<32x1xf32>
    %13 = arith.addf %11, %12 : vector<32x1xf32>
    %14 = math.rsqrt %13 : vector<32x1xf32>
    %15 = vector.broadcast %14 : vector<32x1xf32> to vector<32x128xf32>
    %16 = arith.mulf %6, %15 : vector<32x128xf32>
    %c0_5 = arith.constant 0 : index
    %c0_6 = arith.constant 0 : index
    %17 = vector.load %arg2[%c0_5, %c0_6] : memref<1x128xf32, #tpu.memory_space<vmem>>, vector<1x128xf32>
    %18 = vector.broadcast %17 : vector<1x128xf32> to vector<32x128xf32>
    %19 = arith.mulf %16, %18 : vector<32x128xf32>
    %c0_7 = arith.constant 0 : index
    %c0_8 = arith.constant 0 : index
    %20 = vector.load %arg3[%c0_7, %c0_8] : memref<1x128xf32, #tpu.memory_space<vmem>>, vector<1x128xf32>
    %21 = vector.broadcast %20 : vector<1x128xf32> to vector<32x128xf32>
    %22 = arith.addf %19, %21 : vector<32x128xf32>
    %c0_9 = arith.constant 0 : index
    %c0_10 = arith.constant 0 : index
    %23 = vector.load %arg4[%c0_9, %c0_10] : memref<128x384xf32, #tpu.memory_space<vmem>>, vector<128x384xf32>
    %cst_11 = arith.constant dense<0.000000e+00> : vector<32x384xf32>
    %24 = tpu.matmul %22, %23, %cst_11 {dimension_numbers = #tpu.dot_dimension_numbers<[1], [0], [0], [1], [0, 0, 1, 1], [], []>} : vector<32x128xf32>, vector<128x384xf32>, vector<32x384xf32> -> vector<32x384xf32>
    %c0_12 = arith.constant 0 : index
    %c0_13 = arith.constant 0 : index
    %25 = vector.load %arg5[%c0_12, %c0_13] : memref<1x384xf32, #tpu.memory_space<vmem>>, vector<1x384xf32>
    %26 = vector.broadcast %25 : vector<1x384xf32> to vector<32x384xf32>
    %27 = arith.addf %24, %26 : vector<32x384xf32>
    %28 = vector.extract_strided_slice %27 {offsets = [0, 0], sizes = [32, 128], strides = [1, 1]} : vector<32x384xf32> to vector<32x128xf32>
    %c0_14 = arith.constant 0 : index
    %c0_15 = arith.constant 0 : index
    %29 = vector.load %arg6[%c0_14, %c0_15] : memref<32x128xf32, #tpu.memory_space<vmem>>, vector<32x128xf32>
    tpu.vector_store %arg6[%c0_14, %c0_15], %28 {strides = array<i32>} : memref<32x128xf32, #tpu.memory_space<vmem>>, vector<32x128xf32>,
    %30 = vector.extract_strided_slice %27 {offsets = [0, 128], sizes = [32, 256], strides = [1, 1]} : vector<32x384xf32> to vector<32x256xf32>
    %c0_16 = arith.constant 0 : index
    %c0_17 = arith.constant 0 : index
    %31 = vector.load %arg7[%c0_16, %c0_17] : memref<32x256xf32, #tpu.memory_space<vmem>>, vector<32x256xf32>
    tpu.vector_store %arg7[%c0_16, %c0_17], %30 {strides = array<i32>} : memref<32x256xf32, #tpu.memory_space<vmem>>, vector<32x256xf32>,
    return
  }
  func.func @transform_0(%arg0: i32) -> (i32, i32) {
    %c0_i32 = arith.constant 0 : i32
    %c0_i32_0 = arith.constant 0 : i32
    return %arg0, %c0_i32 : i32, i32
  }
  func.func @transform_1(%arg0: i32) -> (i32, i32) {
    %c0_i32 = arith.constant 0 : i32
    %c0_i32_0 = arith.constant 0 : i32
    %c0_i32_1 = arith.constant 0 : i32
    return %c0_i32, %c0_i32_0 : i32, i32
  }
  func.func @transform_2(%arg0: i32) -> (i32, i32) {
    %c0_i32 = arith.constant 0 : i32
    %c0_i32_0 = arith.constant 0 : i32
    %c0_i32_1 = arith.constant 0 : i32
    return %c0_i32, %c0_i32_0 : i32, i32
  }
  func.func @transform_3(%arg0: i32) -> (i32, i32) {
    %c0_i32 = arith.constant 0 : i32
    %c0_i32_0 = arith.constant 0 : i32
    %c0_i32_1 = arith.constant 0 : i32
    return %c0_i32, %c0_i32_0 : i32, i32
  }
  func.func @transform_4(%arg0: i32) -> (i32, i32) {
    %c0_i32 = arith.constant 0 : i32
    %c0_i32_0 = arith.constant 0 : i32
    %c0_i32_1 = arith.constant 0 : i32
    return %c0_i32, %c0_i32_0 : i32, i32
  }
  func.func @transform_5(%arg0: i32) -> (i32, i32) {
    %c0_i32 = arith.constant 0 : i32
    %c0_i32_0 = arith.constant 0 : i32
    return %arg0, %c0_i32 : i32, i32
  }
  func.func @transform_6(%arg0: i32) -> (i32, i32) {
    %c0_i32 = arith.constant 0 : i32
    %c0_i32_0 = arith.constant 0 : i32
    return %arg0, %c0_i32 : i32, i32
  }
}

</mosaic_0001>

<llo_original>
// kernel: tpu_custom_call.1
$region0: #{tpu_custom_call.1}
  #allocation0 [shape = 'u32[]', space=smem, size = 0x4, offset = 0x4, fixed_abs, tag = 'smem constant byte address 0x4 - core index']
  #allocation1 [shape = 'u32[72,128]{1,0:T(1,128)}', space=vmem, size = 0x9000, scoped, tag = 'internal scratch']
  %s0 = inlined_call_operand.hbm [shape: f32[32,128], index: 0, kind: input, shape index: {}]
  %s1 = inlined_call_operand.hbm [shape: f32[1,128], index: 1, kind: input, shape index: {}]
  %s2 = inlined_call_operand.hbm [shape: f32[1,128], index: 2, kind: input, shape index: {}]
  %s3 = inlined_call_operand.hbm [shape: f32[128,384], index: 3, kind: input, shape index: {}]
  %s4 = inlined_call_operand.vmem [shape: f32[1,384], index: 4, kind: input, shape index: {}]
  %s5 = inlined_call_operand.hbm [shape: f32[32,128], index: 5, kind: output, shape index: {0}]
  %s6 = inlined_call_operand.hbm [shape: f32[32,256], index: 6, kind: output, shape index: {1}]
  %7 = xla_tuple %s5, %s6
  %s8 = sld [smem:[#allocation0]]
  $region54: #{tpu_custom_call.1} parent=0
    _
  %s10 = ssub.s32 1, %s8
  %s11 = scalar_select 0, %s10, %s8
  $region1: #{tpu_custom_call.1} parent=0
    #allocation2 [shape = 'u8[16384]{0}', space=vmem, size = 0x4000, scoped, tag = 'input window, operand 0, single buffered']
    #allocation3 [shape = 's32[1]{0}', space=sflag, size = 0x4, scoped, tag = 'scoped memory for tpu_custom_call.1']
    #allocation4 [shape = 's32[1]{0}', space=sflag, size = 0x4, scoped, tag = 'scoped memory for tpu_custom_call.1']
    #allocation5 [shape = 'u8[512]{0}', space=vmem, size = 0x400, scoped, tag = 'input window, operand 1, single buffered']
    #allocation6 [shape = 's32[1]{0}', space=sflag, size = 0x4, scoped, tag = 'scoped memory for tpu_custom_call.1']
    #allocation7 [shape = 'u8[512]{0}', space=vmem, size = 0x400, scoped, tag = 'input window, operand 2, single buffered']
    #allocation8 [shape = 'u8[196608]{0}', space=vmem, size = 0x30000, scoped, tag = 'input window, operand 3, single buffered']
    #allocation9 [shape = 's32[1]{0}', space=sflag, size = 0x4, scoped, tag = 'scoped memory for tpu_custom_call.1']
    #allocation10 [shape = 'u8[16384]{0}', space=vmem, size = 0x4000, scoped, tag = 'output window, operand 0, single buffered']
    #allocation11 [shape = 'u8[32768]{0}', space=vmem, size = 0x8000, scoped, tag = 'output window, operand 1, single buffered']
    #allocation12 [shape = 's32[1]{0}', space=sflag, size = 0x4, scoped, tag = 'scoped memory for tpu_custom_call.1']
    %12 = vsyncpa [#allocation3], 0
    %13 = vsyncpa [#allocation6], 0
    %14 = vsyncpa [#allocation9], 0
    %15 = vsyncpa [#allocation4], 0
    %16 = vsyncpa [#allocation12], 0
    // Predicated region
    $region2: #{tpu_custom_call.1} parent=1 // pred_check
      _
    $region3: #{tpu_custom_call.1} parent=1 // pred_check_branch
      %18 = sbr.rel (0) target = $region5
    $region4: #{tpu_custom_call.1} parent=1 // pred_region
      %20 = vsyncadd [#allocation3], 0
      %s21 = sshll.u32 %s0, 4
      %s22 = int_to_ptr.hbm [resolvable:$true] %s21
      %s23 = sshll.u32 [#allocation2], 4
      %s24 = int_to_ptr.vmem [resolvable:$true] %s23
      %29 = dma.hbm_to_vmem [thread:$0]  %s22, 512, %s24, [#allocation3], 128, 128, 8
    $region5: #{tpu_custom_call.1} parent=1 // pred_fallthru
      _
    // Predicated region
    $region6: #{tpu_custom_call.1} parent=1 // pred_check
      _
    $region7: #{tpu_custom_call.1} parent=1 // pred_check_branch
      %31 = sbr.rel (0) target = $region9
    $region8: #{tpu_custom_call.1} parent=1 // pred_region
      %33 = vsyncadd [#allocation6], 0
      %s35 = sshll.u32 %s1, 4
      %s36 = int_to_ptr.hbm [resolvable:$true] %s35
      %s37 = sshll.u32 [#allocation5], 4
      %s38 = int_to_ptr.vmem [resolvable:$true] %s37
      %40 = dma.hbm_to_vmem [thread:$0]  %s36, 16, %s38, [#allocation6]
    $region9: #{tpu_custom_call.1} parent=1 // pred_fallthru
      _
    // Predicated region
    $region10: #{tpu_custom_call.1} parent=1 // pred_check
      _
    $region11: #{tpu_custom_call.1} parent=1 // pred_check_branch
      %42 = sbr.rel (0) target = $region13
    $region12: #{tpu_custom_call.1} parent=1 // pred_region
      %44 = vsyncadd [#allocation6], 0
      %s46 = sshll.u32 %s2, 4
      %s47 = int_to_ptr.hbm [resolvable:$true] %s46
      %s48 = sshll.u32 [#allocation7], 4
      %s49 = int_to_ptr.vmem [resolvable:$true] %s48
      %51 = dma.hbm_to_vmem [thread:$0]  %s47, 16, %s49, [#allocation6]
    $region13: #{tpu_custom_call.1} parent=1 // pred_fallthru
      _
    // Predicated region
    $region14: #{tpu_custom_call.1} parent=1 // pred_check
      _
    $region15: #{tpu_custom_call.1} parent=1 // pred_check_branch
      %53 = sbr.rel (0) target = $region17
    $region16: #{tpu_custom_call.1} parent=1 // pred_region
      %55 = vsyncadd [#allocation9], 0
      %s56 = sshll.u32 %s3, 4
      %s57 = int_to_ptr.hbm [resolvable:$true] %s56
      %s58 = sshll.u32 [#allocation8], 4
      %s59 = int_to_ptr.vmem [resolvable:$true] %s58
      %64 = dma.hbm_to_vmem [thread:$0]  %s57, 6144, %s59, [#allocation9], 384, 384, 24
    $region17: #{tpu_custom_call.1} parent=1 // pred_fallthru
      _
    // Predicated region
    $region18: #{tpu_custom_call.1} parent=1 // pred_check
      _
    $region19: #{tpu_custom_call.1} parent=1 // pred_check_branch
      %66 = sbr.rel (0) target = $region21
    $region20: #{tpu_custom_call.1} parent=1 // pred_region
      _
    $region21: #{tpu_custom_call.1} parent=1 // pred_fallthru
      _
    // Predicated region
    $region22: #{tpu_custom_call.1} parent=1 // pred_check
      _
    $region23: #{tpu_custom_call.1} parent=1 // pred_check_branch
      %68 = sbr.rel (0) target = $region25
    $region24: #{tpu_custom_call.1} parent=1 // pred_region
      %70 = dma.done [#allocation3], 512
    $region25: #{tpu_custom_call.1} parent=1 // pred_fallthru
      _
    // Predicated region
    $region26: #{tpu_custom_call.1} parent=1 // pred_check
      _
    $region27: #{tpu_custom_call.1} parent=1 // pred_check_branch
      %72 = sbr.rel (0) target = $region29
    $region28: #{tpu_custom_call.1} parent=1 // pred_region
      %74 = dma.done [#allocation6], 16
    $region29: #{tpu_custom_call.1} parent=1 // pred_fallthru
      _
    // Predicated region
    $region30: #{tpu_custom_call.1} parent=1 // pred_check
      _
    $region31: #{tpu_custom_call.1} parent=1 // pred_check_branch
      %76 = sbr.rel (0) target = $region33
    $region32: #{tpu_custom_call.1} parent=1 // pred_region
      %78 = dma.done [#allocation6], 16
    $region33: #{tpu_custom_call.1} parent=1 // pred_fallthru
      _
    // Predicated region
    $region34: #{tpu_custom_call.1} parent=1 // pred_check
      _
    $region35: #{tpu_custom_call.1} parent=1 // pred_check_branch
      %80 = sbr.rel (0) target = $region37
    $region36: #{tpu_custom_call.1} parent=1 // pred_region
      %82 = dma.done [#allocation9], 6144
    $region37: #{tpu_custom_call.1} parent=1 // pred_fallthru
      _
    %v83 = vld [vmem:[#allocation2] sm:$0xff]
    %v84 = vld [vmem:[#allocation2 + $0x8] sm:$0xff]
    %v85 = vld [vmem:[#allocation2 + $0x10] sm:$0xff]
    %v86 = vld [vmem:[#allocation2 + $0x18] sm:$0xff]
    %87 = vadd.xlane.f32.xlu0 %v83
    %v88 = vpop.xlane.xlu0 %87
    %89 = vadd.xlane.f32.xlu0 %v84
    %v90 = vpop.xlane.xlu0 %89
    %91 = vadd.xlane.f32.xlu0 %v85
    %v92 = vpop.xlane.xlu0 %91
    %93 = vadd.xlane.f32.xlu0 %v86
    %v94 = vpop.xlane.xlu0 %93
    %v95 = vrcp.pop 128.0
    %v96 = vmul.f32 128.0, %v95
    %v97 = vsub.f32 1.0, %v96
    %v98 = vmul.f32 %v95, %v97
    %v99 = vadd.f32 %v95, %v98
    %vm100 = vweird.f32 %v95
    %v101 = vsel %vm100, %v95, %v99
    %v102 = vmul.f32 %v88, %v101
    %v103 = vmul.f32 %v90, %v101
    %v104 = vmul.f32 %v92, %v101
    %v105 = vmul.f32 %v94, %v101
    %v106 = vsub.f32 %v83, %v102
    %v107 = vsub.f32 %v84, %v103
    %v108 = vsub.f32 %v85, %v104
    %v109 = vsub.f32 %v86, %v105
    %v110 = vmul.f32 %v106, %v106
    %v111 = vmul.f32 %v107, %v107
    %v112 = vmul.f32 %v108, %v108
    %v113 = vmul.f32 %v109, %v109
    %114 = vadd.xlane.f32.xlu0 %v110
    %v115 = vpop.xlane.xlu0 %114
    %116 = vadd.xlane.f32.xlu0 %v111
    %v117 = vpop.xlane.xlu0 %116
    %118 = vadd.xlane.f32.xlu0 %v112
    %v119 = vpop.xlane.xlu0 %118
    %120 = vadd.xlane.f32.xlu0 %v113
    %v121 = vpop.xlane.xlu0 %120
    %v122 = vmul.f32 %v115, %v101
    %v123 = vmul.f32 %v117, %v101
    %v124 = vmul.f32 %v119, %v101
    %v125 = vmul.f32 %v121, %v101
    %v126 = vadd.f32 %v122, 1e-05
    %v127 = vadd.f32 %v123, 1e-05
    %v128 = vadd.f32 %v124, 1e-05
    %v129 = vadd.f32 %v125, 1e-05
    %v130 = vrsqrt.pop %v126
    %v131 = vmul.f32 %v130, %v126
    %v132 = vmul.f32 %v131, %v130
    %v133 = vmul.f32 0.5, %v132
    %v134 = vsub.f32 1.5, %v133
    %v135 = vmul.f32 %v130, %v134
    %vm136 = vweird.f32 %v126
    %vm137 = vweird.f32 %v130
    %vm138 = vmor %vm136, %vm137
    %v139 = vsel %vm138, %v130, %v135
    %v140 = vrsqrt.pop %v127
    %v141 = vmul.f32 %v140, %v127
    %v142 = vmul.f32 %v141, %v140
    %v143 = vmul.f32 0.5, %v142
    %v144 = vsub.f32 1.5, %v143
    %v145 = vmul.f32 %v140, %v144
    %vm146 = vweird.f32 %v127
    %vm147 = vweird.f32 %v140
    %vm148 = vmor %vm146, %vm147
    %v149 = vsel %vm148, %v140, %v145
    %v150 = vrsqrt.pop %v128
    %v151 = vmul.f32 %v150, %v128
    %v152 = vmul.f32 %v151, %v150
    %v153 = vmul.f32 0.5, %v152
    %v154 = vsub.f32 1.5, %v153
    %v155 = vmul.f32 %v150, %v154
    %vm156 = vweird.f32 %v128
    %vm157 = vweird.f32 %v150
    %vm158 = vmor %vm156, %vm157
    %v159 = vsel %vm158, %v150, %v155
    %v160 = vrsqrt.pop %v129
    %v161 = vmul.f32 %v160, %v129
    %v162 = vmul.f32 %v161, %v160
    %v163 = vmul.f32 0.5, %v162
    %v164 = vsub.f32 1.5, %v163
    %v165 = vmul.f32 %v160, %v164
    %vm166 = vweird.f32 %v129
    %vm167 = vweird.f32 %v160
    %vm168 = vmor %vm166, %vm167
    %v169 = vsel %vm168, %v160, %v165
    %v170 = vmul.f32 %v106, %v139
    %v171 = vmul.f32 %v107, %v149
    %v172 = vmul.f32 %v108, %v159
    %v173 = vmul.f32 %v109, %v169
    %v174 = vld [vmem:[#allocation5] sm:$0x1]
    %v176 = vperm.slane %v174, 0
    %v178 = vmul.f32 %v170, %v176
    %v179 = vmul.f32 %v171, %v176
    %v180 = vmul.f32 %v172, %v176
    %v181 = vmul.f32 %v173, %v176
    %v182 = vld [vmem:[#allocation7] sm:$0x1]
    %v184 = vperm.slane %v182, 0
    %v186 = vadd.f32 %v178, %v184
    %v187 = vadd.f32 %v179, %v184
    %v188 = vadd.f32 %v180, %v184
    %v189 = vadd.f32 %v181, %v184
    %v190 = vld [vmem:[#allocation8] sm:$0xff]
    %v191 = vld [vmem:[#allocation8 + $0x8] sm:$0xff]
    %v192 = vld [vmem:[#allocation8 + $0x10] sm:$0xff]
    %v193 = vld [vmem:[#allocation8 + $0x18] sm:$0xff]
    %v194 = vld [vmem:[#allocation8 + $0x20] sm:$0xff]
    %v195 = vld [vmem:[#allocation8 + $0x28] sm:$0xff]
    %v196 = vld [vmem:[#allocation8 + $0x30] sm:$0xff]
    %v197 = vld [vmem:[#allocation8 + $0x38] sm:$0xff]
    %v198 = vld [vmem:[#allocation8 + $0x40] sm:$0xff]
    %v199 = vld [vmem:[#allocation8 + $0x48] sm:$0xff]
    %v200 = vld [vmem:[#allocation8 + $0x50] sm:$0xff]
    %v201 = vld [vmem:[#allocation8 + $0x58] sm:$0xff]
    %v202 = vld [vmem:[#allocation8 + $0x60] sm:$0xff]
    %v203 = vld [vmem:[#allocation8 + $0x68] sm:$0xff]
    %v204 = vld [vmem:[#allocation8 + $0x70] sm:$0xff]
    %v205 = vld [vmem:[#allocation8 + $0x78] sm:$0xff]
    %v206 = vld [vmem:[#allocation8 + $0x80] sm:$0xff]
    %v207 = vld [vmem:[#allocation8 + $0x88] sm:$0xff]
    %v208 = vld [vmem:[#allocation8 + $0x90] sm:$0xff]
    %v209 = vld [vmem:[#allocation8 + $0x98] sm:$0xff]
    %v210 = vld [vmem:[#allocation8 + $0xa0] sm:$0xff]
    %v211 = vld [vmem:[#allocation8 + $0xa8] sm:$0xff]
    %v212 = vld [vmem:[#allocation8 + $0xb0] sm:$0xff]
    %v213 = vld [vmem:[#allocation8 + $0xb8] sm:$0xff]
    %v214 = vld [vmem:[#allocation8 + $0xc0] sm:$0xff]
    %v215 = vld [vmem:[#allocation8 + $0xc8] sm:$0xff]
    %v216 = vld [vmem:[#allocation8 + $0xd0] sm:$0xff]
    %v217 = vld [vmem:[#allocation8 + $0xd8] sm:$0xff]
    %v218 = vld [vmem:[#allocation8 + $0xe0] sm:$0xff]
    %v219 = vld [vmem:[#allocation8 + $0xe8] sm:$0xff]
    %v220 = vld [vmem:[#allocation8 + $0xf0] sm:$0xff]
    %v221 = vld [vmem:[#allocation8 + $0xf8] sm:$0xff]
    %v222 = vld [vmem:[#allocation8 + $0x100] sm:$0xff]
    %v223 = vld [vmem:[#allocation8 + $0x108] sm:$0xff]
    %v224 = vld [vmem:[#allocation8 + $0x110] sm:$0xff]
    %v225 = vld [vmem:[#allocation8 + $0x118] sm:$0xff]
    %v226 = vld [vmem:[#allocation8 + $0x120] sm:$0xff]
    %v227 = vld [vmem:[#allocation8 + $0x128] sm:$0xff]
    %v228 = vld [vmem:[#allocation8 + $0x130] sm:$0xff]
    %v229 = vld [vmem:[#allocation8 + $0x138] sm:$0xff]
    %v230 = vld [vmem:[#allocation8 + $0x140] sm:$0xff]
    %v231 = vld [vmem:[#allocation8 + $0x148] sm:$0xff]
    %v232 = vld [vmem:[#allocation8 + $0x150] sm:$0xff]
    %v233 = vld [vmem:[#allocation8 + $0x158] sm:$0xff]
    %v234 = vld [vmem:[#allocation8 + $0x160] sm:$0xff]
    %v235 = vld [vmem:[#allocation8 + $0x168] sm:$0xff]
    %v236 = vld [vmem:[#allocation8 + $0x170] sm:$0xff]
    %v237 = vld [vmem:[#allocation8 + $0x178] sm:$0xff]
    %v238 = vld [vmem:[%s4] sm:$0x7]
    %v240 = vperm.slane %v238, 0
    %v241 = vperm.slane %v238, 1
    %v242 = vperm.slane %v238, 2
    %246 = vmatpush.msra.mxu0 %v235
    %247 = vmatpush.msra.mxu0 %v232
    %248 = vmatpush.msra.mxu0 %v229
    %249 = vmatpush.msra.mxu0 %v226
    %250 = vmatpush.msra.mxu0 %v223
    %251 = vmatpush.msra.mxu0 %v220
    %252 = vmatpush.msra.mxu0 %v217
    %253 = vmatpush.msra.mxu0 %v214
    %254 = vmatpush.msra.mxu0 %v211
    %255 = vmatpush.msra.mxu0 %v208
    %256 = vmatpush.msra.mxu0 %v205
    %257 = vmatpush.msra.mxu0 %v202
    %258 = vmatpush.msra.mxu0 %v199
    %259 = vmatpush.msra.mxu0 %v196
    %260 = vmatpush.msra.mxu0 %v193
    %261 = vmatpush.msra.mxu0 %v190
    %262 = vmatmul.f32.gmra.mxu0 %v186
    %v263 = vpop.f32.mrf.mxu0
    %v264 = vadd.f32 %v240, %v263
    %265 = vmatmul.f32.gmra.mxu0 %v187
    %v266 = vpop.f32.mrf.mxu0
    %v267 = vadd.f32 %v240, %v266
    %268 = vmatmul.f32.gmra.mxu0 %v188
    %v269 = vpop.f32.mrf.mxu0
    %v270 = vadd.f32 %v240, %v269
    %271 = vmatmul.f32.gmra.mxu0 %v189
    %v272 = vpop.f32.mrf.mxu0
    %v273 = vadd.f32 %v240, %v272
    %274 = vdwg.mxu0
    %275 = vmatpush.msra.mxu0 %v236
    %276 = vmatpush.msra.mxu0 %v233
    %277 = vmatpush.msra.mxu0 %v230
    %278 = vmatpush.msra.mxu0 %v227
    %279 = vmatpush.msra.mxu0 %v224
    %280 = vmatpush.msra.mxu0 %v221
    %281 = vmatpush.msra.mxu0 %v218
    %282 = vmatpush.msra.mxu0 %v215
    %283 = vmatpush.msra.mxu0 %v212
    %284 = vmatpush.msra.mxu0 %v209
    %285 = vmatpush.msra.mxu0 %v206
    %286 = vmatpush.msra.mxu0 %v203
    %287 = vmatpush.msra.mxu0 %v200
    %288 = vmatpush.msra.mxu0 %v197
    %289 = vmatpush.msra.mxu0 %v194
    %290 = vmatpush.msra.mxu0 %v191
    %291 = vmatmul.f32.gmra.mxu0 %v186
    %v292 = vpop.f32.mrf.mxu0
    %v293 = vadd.f32 %v241, %v292
    %294 = vmatmul.f32.gmra.mxu0 %v187
    %v295 = vpop.f32.mrf.mxu0
    %v296 = vadd.f32 %v241, %v295
    %297 = vmatmul.f32.gmra.mxu0 %v188
    %v298 = vpop.f32.mrf.mxu0
    %v299 = vadd.f32 %v241, %v298
    %300 = vmatmul.f32.gmra.mxu0 %v189
    %v301 = vpop.f32.mrf.mxu0
    %v302 = vadd.f32 %v241, %v301
    %303 = vdwg.mxu0
    %304 = vmatpush.msra.mxu0 %v237
    %305 = vmatpush.msra.mxu0 %v234
    %306 = vmatpush.msra.mxu0 %v231
    %307 = vmatpush.msra.mxu0 %v228
    %308 = vmatpush.msra.mxu0 %v225
    %309 = vmatpush.msra.mxu0 %v222
    %310 = vmatpush.msra.mxu0 %v219
    %311 = vmatpush.msra.mxu0 %v216
    %312 = vmatpush.msra.mxu0 %v213
    %313 = vmatpush.msra.mxu0 %v210
    %314 = vmatpush.msra.mxu0 %v207
    %315 = vmatpush.msra.mxu0 %v204
    %316 = vmatpush.msra.mxu0 %v201
    %317 = vmatpush.msra.mxu0 %v198
    %318 = vmatpush.msra.mxu0 %v195
    %319 = vmatpush.msra.mxu0 %v192
    %320 = vmatmul.f32.gmra.mxu0 %v186
    %v321 = vpop.f32.mrf.mxu0
    %v322 = vadd.f32 %v242, %v321
    %323 = vmatmul.f32.gmra.mxu0 %v187
    %v324 = vpop.f32.mrf.mxu0
    %v325 = vadd.f32 %v242, %v324
    %326 = vmatmul.f32.gmra.mxu0 %v188
    %v327 = vpop.f32.mrf.mxu0
    %v328 = vadd.f32 %v242, %v327
    %329 = vmatmul.f32.gmra.mxu0 %v189
    %v330 = vpop.f32.mrf.mxu0
    %v331 = vadd.f32 %v242, %v330
    %332 = vdwg.mxu0
    %333 = vst [vmem:[#allocation10] sm:$0xff] %v264
    %334 = vst [vmem:[#allocation10 + $0x8] sm:$0xff] %v267
    %335 = vst [vmem:[#allocation10 + $0x10] sm:$0xff] %v270
    %336 = vst [vmem:[#allocation10 + $0x18] sm:$0xff] %v273
    %337 = vst [vmem:[#allocation11] sm:$0xff] %v293
    %338 = vst [vmem:[#allocation11 + $0x8] sm:$0xff] %v322
    %339 = vst [vmem:[#allocation11 + $0x10] sm:$0xff] %v296
    %340 = vst [vmem:[#allocation11 + $0x18] sm:$0xff] %v325
    %341 = vst [vmem:[#allocation11 + $0x20] sm:$0xff] %v299
    %342 = vst [vmem:[#allocation11 + $0x28] sm:$0xff] %v328
    %343 = vst [vmem:[#allocation11 + $0x30] sm:$0xff] %v302
    %344 = vst [vmem:[#allocation11 + $0x38] sm:$0xff] %v331
    // Predicated region
    $region38: #{tpu_custom_call.1} parent=1 // pred_check
      _
    $region39: #{tpu_custom_call.1} parent=1 // pred_check_branch
      %346 = sbr.rel (0) target = $region41
    $region40: #{tpu_custom_call.1} parent=1 // pred_region
      %348 = vsyncadd [#allocation4], 0
      %s349 = sshll.u32 [#allocation10], 4
      %s350 = int_to_ptr.vmem [resolvable:$true] %s349
      %s351 = sshll.u32 %s5, 4
      %s352 = int_to_ptr.hbm [resolvable:$true] %s351
      %357 = dma.vmem_to_hbm [thread:$0]  %s350, 512, %s352, [#allocation4], 128, 128, 8
    $region41: #{tpu_custom_call.1} parent=1 // pred_fallthru
      _
    // Predicated region
    $region42: #{tpu_custom_call.1} parent=1 // pred_check
      _
    $region43: #{tpu_custom_call.1} parent=1 // pred_check_branch
      %359 = sbr.rel (0) target = $region45
    $region44: #{tpu_custom_call.1} parent=1 // pred_region
      %361 = vsyncadd [#allocation12], 0
      %s362 = sshll.u32 [#allocation11], 4
      %s363 = int_to_ptr.vmem [resolvable:$true] %s362
      %s364 = sshll.u32 %s6, 4
      %s365 = int_to_ptr.hbm [resolvable:$true] %s364
      %370 = dma.vmem_to_hbm [thread:$0]  %s363, 1024, %s365, [#allocation12], 256, 256, 16
    $region45: #{tpu_custom_call.1} parent=1 // pred_fallthru
      _
    // Predicated region
    $region46: #{tpu_custom_call.1} parent=1 // pred_check
      _
    $region47: #{tpu_custom_call.1} parent=1 // pred_check_branch
      %372 = sbr.rel (0) target = $region49
    $region48: #{tpu_custom_call.1} parent=1 // pred_region
      %374 = dma.done [#allocation4], 512
    $region49: #{tpu_custom_call.1} parent=1 // pred_fallthru
      _
    // Predicated region
    $region50: #{tpu_custom_call.1} parent=1 // pred_check
      _
    $region51: #{tpu_custom_call.1} parent=1 // pred_check_branch
      %376 = sbr.rel (0) target = $region53
    $region52: #{tpu_custom_call.1} parent=1 // pred_region
      %378 = dma.done [#allocation12], 1024
    $region53: #{tpu_custom_call.1} parent=1 // pred_fallthru
      _
    %379 = vsyncpa [#allocation3], 1
    %380 = vsyncpa [#allocation6], 1
    %381 = vsyncpa [#allocation9], 1
    %382 = vsyncpa [#allocation4], 1
    %383 = vsyncpa [#allocation12], 1

</llo_original>
